<compile_context>
chip_gen: v7x
topology: tpu7x:2x2x1
jax: 0.10.0
libtpu: 0.0.40
codegen_flags: <defaults>
</compile_context>

<pallas_src>
import functools

import jax
import jax.numpy as jnp
from jax.experimental import pallas as pl
from jax.experimental.pallas import tpu as pltpu

LANES = 128
_MIN_STEPS_PER_SLICE = 4   # keep the double-buffered pipeline warm


def _round_up(a, b):
    return (a + b - 1) // b * b


def _detect_hw():
    """Best-effort TensorCore-count / VMEM detection (safe fallbacks)."""
    vmem_bytes = 64 * 1024 * 1024   # conservative (v7x-sized) default
    num_cores = 1
    try:
        info = pltpu.get_tpu_info()
        v = getattr(info, "vmem_capacity_bytes", None)
        if isinstance(v, int) and v > 0:
            vmem_bytes = v
        for name in ("num_cores", "core_count", "num_tensorcores",
                     "tensorcore_count", "num_cores_per_chip"):
            c = getattr(info, name, None)
            if isinstance(c, int) and c > 0:
                num_cores = c
                break
    except Exception:
        pass
    return vmem_bytes, num_cores


_VMEM_BYTES, _NUM_CORES = _detect_hw()

# Large-VMEM single-TC parts (v5e/v6e, 128 MiB): 8192-row tiles (4 MiB/block,
# 32 MiB double-buffered inputs) with a 48 MiB scoped limit.  Multi-TC or
# smaller/unknown VMEM (v7x, 64 MiB per TC): 4096-row tiles under 32 MiB.
if _VMEM_BYTES >= 100 * 1024 * 1024 and _NUM_CORES == 1:
    _MAX_TILE_ROWS = 8192
    _VMEM_LIMIT = 48 * 1024 * 1024
else:
    _MAX_TILE_ROWS = 4096
    _VMEM_LIMIT = 32 * 1024 * 1024

_CORE_PARALLEL = getattr(pltpu, "CORE_PARALLEL", "parallel")
_ARBITRARY = getattr(pltpu, "ARBITRARY", "arbitrary")


def _pick_tile_rows(rows, num_slices):
    max_aligned = max(8, (rows // 8) * 8)            # largest mult-of-8 <= rows
    target_tiles = max(1, num_slices * _MIN_STEPS_PER_SLICE)
    t = _round_up(pl.cdiv(rows, target_tiles), 8)
    return max(8, min(t, _MAX_TILE_ROWS, max_aligned))


def _pick_chunk_rows(tile_rows):
    # Largest divisor of tile_rows among {256,...,8}: keeps per-chunk live
    # vregs small enough to avoid spills (tile_rows is always a multiple of 8).
    for c in (256, 128, 64, 32, 16, 8):
        if tile_rows % c == 0:
            return c
    return tile_rows


def _sse_kernel(x_ref, r_ref, w_ref, p_ref, out_ref, acc_ref, *,
                tile_rows, chunk_rows, inner_tiles, valid_elems,
                two_axes, unroll, needs_mask_path):
    """Accumulates sum-of-squared-errors of 3 tensors vs. the reference x."""
    if two_axes:
        c = pl.program_id(0)            # slice axis (one per TensorCore)
        i = pl.program_id(1)            # streaming / reduction axis
        n_i = pl.num_programs(1)
    else:
        c = 0
        i = pl.program_id(0)
        n_i = pl.num_programs(0)

    @pl.when(i == 0)
    def _init():
        acc_ref[...] = jnp.zeros_like(acc_ref)

    row0 = (c * inner_tiles + i) * tile_rows       # global (unclamped) row
    n_chunks = tile_rows // chunk_rows

    def accumulate(masked):
        def body(k, carry):
            sr, sw, sp = carry
            off = pl.multiple_of(k * chunk_rows, chunk_rows)
            x = x_ref[pl.ds(off, chunk_rows), :].astype(jnp.float32)
            r = r_ref[pl.ds(off, chunk_rows), :].astype(jnp.float32)
            w = w_ref[pl.ds(off, chunk_rows), :].astype(jnp.float32)
            p = p_ref[pl.ds(off, chunk_rows), :].astype(jnp.float32)
            dr, dw, dp = r - x, w - x, p - x
            if masked:
                # Element-level validity: flat index < true element count.
                base = (row0 + off) * LANES
                flat = (base
                        + jax.lax.broadcasted_iota(
                            jnp.int32, (chunk_rows, LANES), 0) * LANES
                        + jax.lax.broadcasted_iota(
                            jnp.int32, (chunk_rows, LANES), 1))
                ok = flat < valid_elems
                dr = jnp.where(ok, dr, 0.0)
                dw = jnp.where(ok, dw, 0.0)
                dp = jnp.where(ok, dp, 0.0)

            def fold(d):
                # (chunk_rows, 128) -> (8, 128): pure vreg adds over major axis.
                return jnp.sum((d * d).reshape(chunk_rows // 8, 8, LANES),
                               axis=0)

            return sr + fold(dr), sw + fold(dw), sp + fold(dp)

        zero = jnp.zeros((8, LANES), jnp.float32)
        sr, sw, sp = jax.lax.fori_loop(0, n_chunks, body, (zero, zero, zero),
                                       unroll=unroll)
        acc_ref[0] += sr
        acc_ref[1] += sw
        acc_ref[2] += sp

    if needs_mask_path:
        tile_start = row0 * LANES
        tile_end = tile_start + tile_rows * LANES

        @pl.when(tile_end <= valid_elems)          # interior tile: no mask
        def _fast():
            accumulate(False)

        @pl.when(jnp.logical_and(tile_start < valid_elems,
                                 tile_end > valid_elems))
        def _boundary():                            # only the boundary tile
            accumulate(True)
        # Tiles entirely past valid_elems (clamped duplicates) add nothing.
    else:
        accumulate(False)

    @pl.when(i == n_i - 1)
    def _finalize():
        out_ref[0] = acc_ref[...]


def _as_slab(x, n_elems, rows):
    """Flatten to [rows, 128]; pads only for genuinely ragged / tiny sizes."""
    flat = x.reshape(-1)                       # free for contiguous inputs
    pad = rows * LANES - n_elems
    if pad:
        # Rare fallback (numel % 128 != 0 or numel < 1024); padded elements
        # are excluded in-kernel via the element-count mask anyway.
        flat = jnp.pad(flat, (0, pad))
    return flat.reshape(rows, LANES)


@functools.partial(jax.jit, static_argnames=("warpweight", "train_lambda"))
def compression_loss(input_img, recon_image, warpframe, prediction, bpp,
                     *, warpweight, train_lambda):
    n_elems = input_img.size               # nn.MSELoss default reduction='mean'
    rows = max(pl.cdiv(n_elems, LANES), 8)

    num_slices = max(1, _NUM_CORES)
    tile_rows = _pick_tile_rows(rows, num_slices)
    num_tiles = pl.cdiv(rows, tile_rows)
    num_slices = min(num_slices, num_tiles)
    inner_tiles = pl.cdiv(num_tiles, num_slices)
    max_block = num_tiles - 1
    two_axes = num_slices > 1

    chunk_rows = _pick_chunk_rows(tile_rows)
    n_chunks = tile_rows // chunk_rows
    unroll = True if n_chunks <= 8 else 2

    coverage_elems = num_slices * inner_tiles * tile_rows * LANES
    needs_mask_path = coverage_elems != n_elems

    slabs = [_as_slab(t, n_elems, rows)
             for t in (input_img, recon_image, warpframe, prediction)]

    if two_axes:
        def in_map(c, i):
            # Clamp so over-covered slices re-read a valid block (masked out).
            return (jnp.minimum(c * inner_tiles + i, max_block), 0)
        out_map = lambda c, i: (c, 0, 0, 0)
        grid = (num_slices, inner_tiles)
        dims = (_CORE_PARALLEL, _ARBITRARY)
    else:
        def in_map(i):
            return (i, 0)
        out_map = lambda i: (0, 0, 0, 0)
        grid = (inner_tiles,)
        dims = (_ARBITRARY,)

    tile_spec = pl.BlockSpec((tile_rows, LANES), in_map)

    kernel = functools.partial(
        _sse_kernel,
        tile_rows=tile_rows, chunk_rows=chunk_rows, inner_tiles=inner_tiles,
        valid_elems=n_elems, two_axes=two_axes, unroll=unroll,
        needs_mask_path=needs_mask_path)

    partials = pl.pallas_call(
        kernel,
        out_shape=jax.ShapeDtypeStruct((num_slices, 3, 8, LANES), jnp.float32),
        grid_spec=pltpu.PrefetchScalarGridSpec(
            num_scalar_prefetch=0,
            grid=grid,
            in_specs=[tile_spec, tile_spec, tile_spec, tile_spec],
            out_specs=pl.BlockSpec((1, 3, 8, LANES), out_map),
            scratch_shapes=[pltpu.VMEM((3, 8, LANES), jnp.float32)],
        ),
        compiler_params=pltpu.CompilerParams(
            dimension_semantics=dims,
            vmem_limit_bytes=_VMEM_LIMIT),
    )(*slabs)

    sse = jnp.sum(partials, axis=(0, 2, 3))   # (3,) tiny partial-sum reduce

    inv_n = 1.0 / float(n_elems)
    mse_loss = sse[0] * inv_n
    warploss = sse[1] * inv_n
    interloss = sse[2] * inv_n

    distortion_loss = mse_loss + warpweight * (warploss + interloss)
    distribution_loss = bpp
    rd_loss = train_lambda * distortion_loss + distribution_loss
    psnr = 10.0 * jnp.log10(1.0 / mse_loss)   # inputs assumed normalized to [0,1]
    return rd_loss, psnr


if __name__ == "__main__":
    key = jax.random.PRNGKey(0)
    k1, k2, k3, k4 = jax.random.split(key, 4)

    B, C, H, W = 2, 4, 16, 16  # NCHW, small synthetic shapes
    input_img = jax.random.uniform(k1, (B, C, H, W), dtype=jnp.float32)
    recon_image = jax.random.uniform(k2, (B, C, H, W), dtype=jnp.float32)
    warpframe = jax.random.uniform(k3, (B, C, H, W), dtype=jnp.float32)
    prediction = jax.random.uniform(k4, (B, C, H, W), dtype=jnp.float32)
    bpp = jnp.float32(0.35)

    warpweight = 0.1
    train_lambda = 2048.0

    rd_loss, psnr = compression_loss(
        input_img, recon_image, warpframe, prediction, bpp,
        warpweight=warpweight, train_lambda=train_lambda)
    jax.block_until_ready((rd_loss, psnr))

    # Pure-JAX reference check.
    def ref_mse(a, b):
        return jnp.mean((a - b) ** 2)

    mse_r = ref_mse(recon_image, input_img)
    mse_w = ref_mse(warpframe, input_img)
    mse_p = ref_mse(prediction, input_img)
    dist = mse_r + warpweight * (mse_w + mse_p)
    rd_ref = train_lambda * dist + bpp
    psnr_ref = 10.0 * jnp.log10(1.0 / mse_r)

    assert jnp.allclose(rd_loss, rd_ref, rtol=1e-4, atol=1e-4), (rd_loss, rd_ref)
    assert jnp.allclose(psnr, psnr_ref, rtol=1e-4, atol=1e-4), (psnr, psnr_ref)

    print("KERNEL_OK")
</pallas_src>

<mosaic_0001>
module attributes {stable_mosaic.version = 11 : i64} {
  func.func @_sse_kernel(%arg0: i32, %arg1: memref<8x128xf32, #tpu.memory_space<vmem>>, %arg2: memref<8x128xf32, #tpu.memory_space<vmem>>, %arg3: memref<8x128xf32, #tpu.memory_space<vmem>>, %arg4: memref<8x128xf32, #tpu.memory_space<vmem>>, %arg5: memref<1x3x8x128xf32, #tpu.memory_space<vmem>>, %arg6: memref<3x8x128xf32, #tpu.memory_space<vmem>>) attributes {dimension_semantics = [#tpu.dimension_semantics<arbitrary>], iteration_bounds = array<i64: 2>, scalar_prefetch = 0 : i64, scratch_operands = 1 : i64, tpu.core_type = #tpu.core_type<tc>, window_params = [{transform_indices = @transform_0, window_bounds = array<i64: 8, 128>}, {transform_indices = @transform_1, window_bounds = array<i64: 8, 128>}, {transform_indices = @transform_2, window_bounds = array<i64: 8, 128>}, {transform_indices = @transform_3, window_bounds = array<i64: 8, 128>}, {pipeline_mode = #tpu.pipeline_mode<synchronous>, transform_indices = @transform_4, window_bounds = array<i64: 1, 3, 8, 128>}]} {
    %c0_i32 = arith.constant 0 : i32
    %0 = arith.cmpi eq, %arg0, %c0_i32 : i32
    %1 = arith.extui %0 : i1 to i32
    %c0_i32_0 = arith.constant 0 : i32
    %2 = arith.cmpi ne, %1, %c0_i32_0 : i32
    scf.if %2 {
      %cst_26 = arith.constant 0.000000e+00 : f32
      %50 = vector.broadcast %cst_26 : f32 to vector<3x8x128xf32>
      %c0_27 = arith.constant 0 : index
      %c0_28 = arith.constant 0 : index
      %c0_29 = arith.constant 0 : index
      %51 = vector.load %arg6[%c0_27, %c0_28, %c0_29] : memref<3x8x128xf32, #tpu.memory_space<vmem>>, vector<3x8x128xf32>
      tpu.vector_store %arg6[%c0_27, %c0_28, %c0_29], %50 {strides = array<i32>} : memref<3x8x128xf32, #tpu.memory_space<vmem>>, vector<3x8x128xf32>,
    } else {
    }
    %cst = arith.constant 0.000000e+00 : f32
    %3 = vector.broadcast %cst : f32 to vector<8x128xf32>
    %c0_i32_1 = arith.constant 0 : i32
    %c8_i32 = arith.constant 8 : i32
    %4 = arith.muli %c0_i32_1, %c8_i32 : i32
    %5 = tpu.assume_multiple %4, 8 : i32
    %6 = arith.index_cast %5 : i32 to index
    %c0 = arith.constant 0 : index
    %7 = vector.load %arg1[%6, %c0] : memref<8x128xf32, #tpu.memory_space<vmem>>, vector<8x128xf32>
    %8 = arith.index_cast %5 : i32 to index
    %c0_2 = arith.constant 0 : index
    %9 = vector.load %arg2[%8, %c0_2] : memref<8x128xf32, #tpu.memory_space<vmem>>, vector<8x128xf32>
    %10 = arith.index_cast %5 : i32 to index
    %c0_3 = arith.constant 0 : index
    %11 = vector.load %arg3[%10, %c0_3] : memref<8x128xf32, #tpu.memory_space<vmem>>, vector<8x128xf32>
    %12 = arith.index_cast %5 : i32 to index
    %c0_4 = arith.constant 0 : index
    %13 = vector.load %arg4[%12, %c0_4] : memref<8x128xf32, #tpu.memory_space<vmem>>, vector<8x128xf32>
    %14 = arith.subf %9, %7 : vector<8x128xf32>
    %15 = arith.subf %11, %7 : vector<8x128xf32>
    %16 = arith.subf %13, %7 : vector<8x128xf32>
    %17 = arith.mulf %14, %14 : vector<8x128xf32>
    %18 = vector.shape_cast %17 : vector<8x128xf32> to vector<1x8x128xf32>
    %cst_5 = arith.constant dense<0.000000e+00> : vector<8x128xf32>
    %19 = vector.multi_reduction <add>, %18, %cst_5 [0] : vector<1x8x128xf32> to vector<8x128xf32>
    %20 = arith.addf %3, %19 : vector<8x128xf32>
    %21 = arith.mulf %15, %15 : vector<8x128xf32>
    %22 = vector.shape_cast %21 : vector<8x128xf32> to vector<1x8x128xf32>
    %cst_6 = arith.constant dense<0.000000e+00> : vector<8x128xf32>
    %23 = vector.multi_reduction <add>, %22, %cst_6 [0] : vector<1x8x128xf32> to vector<8x128xf32>
    %24 = arith.addf %3, %23 : vector<8x128xf32>
    %25 = arith.mulf %16, %16 : vector<8x128xf32>
    %26 = vector.shape_cast %25 : vector<8x128xf32> to vector<1x8x128xf32>
    %cst_7 = arith.constant dense<0.000000e+00> : vector<8x128xf32>
    %27 = vector.multi_reduction <add>, %26, %cst_7 [0] : vector<1x8x128xf32> to vector<8x128xf32>
    %28 = arith.addf %3, %27 : vector<8x128xf32>
    %c1_i32 = arith.constant 1 : i32
    %c0_8 = arith.constant 0 : index
    %c0_9 = arith.constant 0 : index
    %c0_10 = arith.constant 0 : index
    %29 = vector.load %arg6[%c0_8, %c0_9, %c0_10] : memref<3x8x128xf32, #tpu.memory_space<vmem>>, vector<1x8x128xf32>
    %30 = vector.shape_cast %29 : vector<1x8x128xf32> to vector<8x128xf32>
    %31 = arith.addf %30, %20 : vector<8x128xf32>
    %c0_11 = arith.constant 0 : index
    %c0_12 = arith.constant 0 : index
    %c0_13 = arith.constant 0 : index
    %32 = vector.load %arg6[%c0_11, %c0_12, %c0_13] : memref<3x8x128xf32, #tpu.memory_space<vmem>>, vector<1x8x128xf32>
    %33 = vector.shape_cast %32 : vector<1x8x128xf32> to vector<8x128xf32>
    %34 = vector.shape_cast %31 : vector<8x128xf32> to vector<1x8x128xf32>
    tpu.vector_store %arg6[%c0_11, %c0_12, %c0_13], %34 {strides = array<i32>} : memref<3x8x128xf32, #tpu.memory_space<vmem>>, vector<1x8x128xf32>,
    %c1 = arith.constant 1 : index
    %c0_14 = arith.constant 0 : index
    %c0_15 = arith.constant 0 : index
    %35 = vector.load %arg6[%c1, %c0_14, %c0_15] : memref<3x8x128xf32, #tpu.memory_space<vmem>>, vector<1x8x128xf32>
    %36 = vector.shape_cast %35 : vector<1x8x128xf32> to vector<8x128xf32>
    %37 = arith.addf %36, %24 : vector<8x128xf32>
    %c1_16 = arith.constant 1 : index
    %c0_17 = arith.constant 0 : index
    %c0_18 = arith.constant 0 : index
    %38 = vector.load %arg6[%c1_16, %c0_17, %c0_18] : memref<3x8x128xf32, #tpu.memory_space<vmem>>, vector<1x8x128xf32>
    %39 = vector.shape_cast %38 : vector<1x8x128xf32> to vector<8x128xf32>
    %40 = vector.shape_cast %37 : vector<8x128xf32> to vector<1x8x128xf32>
    tpu.vector_store %arg6[%c1_16, %c0_17, %c0_18], %40 {strides = array<i32>} : memref<3x8x128xf32, #tpu.memory_space<vmem>>, vector<1x8x128xf32>,
    %c2 = arith.constant 2 : index
    %c0_19 = arith.constant 0 : index
    %c0_20 = arith.constant 0 : index
    %41 = vector.load %arg6[%c2, %c0_19, %c0_20] : memref<3x8x128xf32, #tpu.memory_space<vmem>>, vector<1x8x128xf32>
    %42 = vector.shape_cast %41 : vector<1x8x128xf32> to vector<8x128xf32>
    %43 = arith.addf %42, %28 : vector<8x128xf32>
    %c2_21 = arith.constant 2 : index
    %c0_22 = arith.constant 0 : index
    %c0_23 = arith.constant 0 : index
    %44 = vector.load %arg6[%c2_21, %c0_22, %c0_23] : memref<3x8x128xf32, #tpu.memory_space<vmem>>, vector<1x8x128xf32>
    %45 = vector.shape_cast %44 : vector<1x8x128xf32> to vector<8x128xf32>
    %46 = vector.shape_cast %43 : vector<8x128xf32> to vector<1x8x128xf32>
    tpu.vector_store %arg6[%c2_21, %c0_22, %c0_23], %46 {strides = array<i32>} : memref<3x8x128xf32, #tpu.memory_space<vmem>>, vector<1x8x128xf32>,
    %c1_i32_24 = arith.constant 1 : i32
    %47 = arith.cmpi eq, %arg0, %c1_i32_24 : i32
    %48 = arith.extui %47 : i1 to i32
    %c0_i32_25 = arith.constant 0 : i32
    %49 = arith.cmpi ne, %48, %c0_i32_25 : i32
    scf.if %49 {
      %c0_26 = arith.constant 0 : index
      %c0_27 = arith.constant 0 : index
      %c0_28 = arith.constant 0 : index
      %50 = vector.load %arg6[%c0_26, %c0_27, %c0_28] : memref<3x8x128xf32, #tpu.memory_space<vmem>>, vector<3x8x128xf32>
      %c0_29 = arith.constant 0 : index
      %c0_30 = arith.constant 0 : index
      %c0_31 = arith.constant 0 : index
      %c0_32 = arith.constant 0 : index
      %51 = vector.load %arg5[%c0_29, %c0_30, %c0_31, %c0_32] : memref<1x3x8x128xf32, #tpu.memory_space<vmem>>, vector<1x3x8x128xf32>
      %52 = vector.shape_cast %51 : vector<1x3x8x128xf32> to vector<3x8x128xf32>
      %53 = vector.shape_cast %50 : vector<3x8x128xf32> to vector<1x3x8x128xf32>
      tpu.vector_store %arg5[%c0_29, %c0_30, %c0_31, %c0_32], %53 {strides = array<i32>} : memref<1x3x8x128xf32, #tpu.memory_space<vmem>>, vector<1x3x8x128xf32>,
    } else {
    }
    return
  }
  func.func @transform_0(%arg0: i32) -> (i32, i32) {
    %c0_i32 = arith.constant 0 : i32
    %c0_i32_0 = arith.constant 0 : i32
    return %arg0, %c0_i32 : i32, i32
  }
  func.func @transform_1(%arg0: i32) -> (i32, i32) {
    %c0_i32 = arith.constant 0 : i32
    %c0_i32_0 = arith.constant 0 : i32
    return %arg0, %c0_i32 : i32, i32
  }
  func.func @transform_2(%arg0: i32) -> (i32, i32) {
    %c0_i32 = arith.constant 0 : i32
    %c0_i32_0 = arith.constant 0 : i32
    return %arg0, %c0_i32 : i32, i32
  }
  func.func @transform_3(%arg0: i32) -> (i32, i32) {
    %c0_i32 = arith.constant 0 : i32
    %c0_i32_0 = arith.constant 0 : i32
    return %arg0, %c0_i32 : i32, i32
  }
  func.func @transform_4(%arg0: i32) -> (i32, i32, i32, i32) {
    %c0_i32 = arith.constant 0 : i32
    %c0_i32_0 = arith.constant 0 : i32
    %c0_i32_1 = arith.constant 0 : i32
    %c0_i32_2 = arith.constant 0 : i32
    %c0_i32_3 = arith.constant 0 : i32
    return %c0_i32, %c0_i32_0, %c0_i32_1, %c0_i32_2 : i32, i32, i32, i32
  }
}

</mosaic_0001>

<llo_original>
// kernel: compression_loss.1
$region0: #{compression_loss.1}
  #allocation0 [shape = 'u32[]', space=smem, size = 0x4, offset = 0x4, fixed_abs, tag = 'smem constant byte address 0x4 - core index']
  #allocation1 [shape = 'u32[144,128]{1,0:T(1,128)}', space=vmem, size = 0x12000, scoped, tag = 'internal scratch']
  #allocation2 [shape = 'f32[3,8,128]{2,1,0:T(8,128)}', space=vmem, size = 0x3000, scoped, tag = 'scratch operand']
  %s0 = inlined_call_operand.vmem [shape: f32[16,128], index: 0, kind: input, shape index: {}]
  %s1 = inlined_call_operand.vmem [shape: f32[16,128], index: 1, kind: input, shape index: {}]
  %s2 = inlined_call_operand.vmem [shape: f32[16,128], index: 2, kind: input, shape index: {}]
  %s3 = inlined_call_operand.vmem [shape: f32[16,128], index: 3, kind: input, shape index: {}]
  %s4 = inlined_call_operand.vmem [shape: f32[1,3,8,128], index: 4, kind: output, shape index: {}]
  %s5 = sld [smem:[#allocation0]]
  $region57: #{compression_loss.1} parent=0
    _
  %s7 = ssub.s32 1, %s5
  %s8 = scalar_select 0, %s7, %s5
  loop: start=0, step=1, limit=4
  $region2: #{compression_loss.1} parent=0 // loop_pre_header
    _
  $region3: #{compression_loss.1} parent=0 // loop_header
    %s10 = sphi 0, %s14
    %p11 = scmp.ge.s32.totalorder %s10, 4
    %s20 = sphi 0, %s22
    %s23 = sphi 0, %s20
    %s24 = sphi 0, %s23
    %s40 = sphi 0, %s24
    %s46 = sphi 0, %s48
    %s49 = sphi 0, %s46
    %s50 = sphi 0, %s49
    %s66 = sphi 0, %s50
    %s72 = sphi 0, %s74
    %s75 = sphi 0, %s72
    %s76 = sphi 0, %s75
    %s92 = sphi 0, %s76
    %s98 = sphi 0, %s100
    %s101 = sphi 0, %s98
    %s102 = sphi 0, %s101
    %s118 = sphi 0, %s102
    %s122 = sphi 0, %s122
    %s124 = sphi 0, %s122
    %s125 = sphi 0, %s124
    %s139 = sphi 0, %s125
  $region4: #{compression_loss.1} parent=0 // loop_header_branch
    %13 = sbr.rel (%p11) target = $region8
  $region5: #{compression_loss.1} parent=0 // loop_body
    %s15 = ssub.s32 %s10, 1
    %s16 = ssub.s32 %s10, 2
    %s17 = sadd.s32 %s10, 1
    %s18 = ssub.s32 %s10, %s17
    %p19 = scmp.eq.s32.totalorder %s18, 0
    %s21 = sadd.s32 %s20, 1
    %s22 = scalar_select %p19, %s20, %s21
    %p25 = pneg %p19
    %p26 = scmp.eq.s32.totalorder %s10, 1
    %p27 = por %p25, %p26
    %p28 = scmp.ne.s32.totalorder %s20, %s23
    %p29 = scmp.eq.s32.totalorder %s10, 0
    %p30 = por %p28, %p29
    %p31 = scmp.ne.s32.totalorder %s20, %s23
    %p32 = scmp.eq.s32.totalorder %s15, 1
    %p33 = por %p31, %p32
    %p34 = scmp.ne.s32.totalorder %s23, %s24
    %p35 = scmp.eq.s32.totalorder %s15, 0
    %p36 = por %p34, %p35
    %p37 = scmp.ne.s32.totalorder %s23, %s24
    %p38 = scmp.eq.s32.totalorder %s16, 1
    %p39 = por %p37, %p38
    %p41 = scmp.ne.s32.totalorder %s24, %s40
    %p42 = scmp.eq.s32.totalorder %s16, 0
    %p43 = por %p41, %p42
    %s44 = ssub.s32 %s10, %s17
    %p45 = scmp.eq.s32.totalorder %s44, 0
    %s47 = sadd.s32 %s46, 1
    %s48 = scalar_select %p45, %s46, %s47
    %p51 = pneg %p45
    %p52 = scmp.eq.s32.totalorder %s10, 1
    %p53 = por %p51, %p52
    %p54 = scmp.ne.s32.totalorder %s46, %s49
    %p55 = scmp.eq.s32.totalorder %s10, 0
    %p56 = por %p54, %p55
    %p57 = scmp.ne.s32.totalorder %s46, %s49
    %p58 = scmp.eq.s32.totalorder %s15, 1
    %p59 = por %p57, %p58
    %p60 = scmp.ne.s32.totalorder %s49, %s50
    %p61 = scmp.eq.s32.totalorder %s15, 0
    %p62 = por %p60, %p61
    %p63 = scmp.ne.s32.totalorder %s49, %s50
    %p64 = scmp.eq.s32.totalorder %s16, 1
    %p65 = por %p63, %p64
    %p67 = scmp.ne.s32.totalorder %s50, %s66
    %p68 = scmp.eq.s32.totalorder %s16, 0
    %p69 = por %p67, %p68
    %s70 = ssub.s32 %s10, %s17
    %p71 = scmp.eq.s32.totalorder %s70, 0
    %s73 = sadd.s32 %s72, 1
    %s74 = scalar_select %p71, %s72, %s73
    %p77 = pneg %p71
    %p78 = scmp.eq.s32.totalorder %s10, 1
    %p79 = por %p77, %p78
    %p80 = scmp.ne.s32.totalorder %s72, %s75
    %p81 = scmp.eq.s32.totalorder %s10, 0
    %p82 = por %p80, %p81
    %p83 = scmp.ne.s32.totalorder %s72, %s75
    %p84 = scmp.eq.s32.totalorder %s15, 1
    %p85 = por %p83, %p84
    %p86 = scmp.ne.s32.totalorder %s75, %s76
    %p87 = scmp.eq.s32.totalorder %s15, 0
    %p88 = por %p86, %p87
    %p89 = scmp.ne.s32.totalorder %s75, %s76
    %p90 = scmp.eq.s32.totalorder %s16, 1
    %p91 = por %p89, %p90
    %p93 = scmp.ne.s32.totalorder %s76, %s92
    %p94 = scmp.eq.s32.totalorder %s16, 0
    %p95 = por %p93, %p94
    %s96 = ssub.s32 %s10, %s17
    %p97 = scmp.eq.s32.totalorder %s96, 0
    %s99 = sadd.s32 %s98, 1
    %s100 = scalar_select %p97, %s98, %s99
    %p103 = pneg %p97
    %p104 = scmp.eq.s32.totalorder %s10, 1
    %p105 = por %p103, %p104
    %p106 = scmp.ne.s32.totalorder %s98, %s101
    %p107 = scmp.eq.s32.totalorder %s10, 0
    %p108 = por %p106, %p107
    %p109 = scmp.ne.s32.totalorder %s98, %s101
    %p110 = scmp.eq.s32.totalorder %s15, 1
    %p111 = por %p109, %p110
    %p112 = scmp.ne.s32.totalorder %s101, %s102
    %p113 = scmp.eq.s32.totalorder %s15, 0
    %p114 = por %p112, %p113
    %p115 = scmp.ne.s32.totalorder %s101, %s102
    %p116 = scmp.eq.s32.totalorder %s16, 1
    %p117 = por %p115, %p116
    %p119 = scmp.ne.s32.totalorder %s102, %s118
    %p120 = scmp.eq.s32.totalorder %s16, 0
    %p121 = por %p119, %p120
    %s123 = sadd.s32 %s122, 1
    %p126 = scmp.eq.s32.totalorder %s10, 1
    %p127 = scmp.ne.s32.totalorder %s122, %s124
    %p128 = scmp.eq.s32.totalorder %s10, 0
    %p129 = por %p127, %p128
    %p130 = scmp.ne.s32.totalorder %s122, %s124
    %p131 = scmp.eq.s32.totalorder %s15, 1
    %p132 = por %p130, %p131
    %p133 = scmp.ne.s32.totalorder %s124, %s125
    %p134 = scmp.eq.s32.totalorder %s15, 0
    %p135 = por %p133, %p134
    %p136 = scmp.ne.s32.totalorder %s124, %s125
    %p137 = scmp.eq.s32.totalorder %s16, 1
    %p138 = por %p136, %p137
    %p140 = scmp.ne.s32.totalorder %s125, %s139
    %p141 = scmp.eq.s32.totalorder %s16, 0
    %p142 = por %p140, %p141
    %p143 = scmp.le.s32.totalorder 1, %s10
    %p144 = scmp.lt.s32.totalorder %s10, 3
    %p145 = pnand %p143, %p144
    %p146 = pneg %p145
    // Predicated region
    $region9: #{compression_loss.1} parent=5 // pred_check
      _
    $region10: #{compression_loss.1} parent=5 // pred_check_branch
      %148 = sbr.rel (%p145) target = $region12
    $region11: #{compression_loss.1} parent=5 // pred_region
      %s149 = ssub.s32 %s10, 1
    $region12: #{compression_loss.1} parent=5 // pred_fallthru
      _
    %p150 = scmp.lt.s32.totalorder %s10, 2
    // Predicated region
    $region13: #{compression_loss.1} parent=5 // pred_check
      %p151 = pneg %p150
    $region14: #{compression_loss.1} parent=5 // pred_check_branch
      %153 = sbr.rel (%p151) target = $region16
    $region15: #{compression_loss.1} parent=5 // pred_region
      // Predicated region
      $region17: #{compression_loss.1} parent=15 // pred_check
        %p154 = pneg %p30
      $region18: #{compression_loss.1} parent=15 // pred_check_branch
        %156 = sbr.rel (%p154) target = $region20
      $region19: #{compression_loss.1} parent=15 // pred_region
        %p157 = scmp.lt.s32.totalorder %s10, 1
        %s158 = scalar_select %p157, %s10, 1
        %s159 = smul.addr %s158, 8
        %s160 = scalar_lea.vmem %s0, %s159
      $region20: #{compression_loss.1} parent=15 // pred_fallthru
        _
      // Predicated region
      $region21: #{compression_loss.1} parent=15 // pred_check
        %p161 = pneg %p56
      $region22: #{compression_loss.1} parent=15 // pred_check_branch
        %163 = sbr.rel (%p161) target = $region24
      $region23: #{compression_loss.1} parent=15 // pred_region
        %p164 = scmp.lt.s32.totalorder %s10, 1
        %s165 = scalar_select %p164, %s10, 1
        %s166 = smul.addr %s165, 8
        %s167 = scalar_lea.vmem %s1, %s166
      $region24: #{compression_loss.1} parent=15 // pred_fallthru
        _
      // Predicated region
      $region25: #{compression_loss.1} parent=15 // pred_check
        %p168 = pneg %p82
      $region26: #{compression_loss.1} parent=15 // pred_check_branch
        %170 = sbr.rel (%p168) target = $region28
      $region27: #{compression_loss.1} parent=15 // pred_region
        %p171 = scmp.lt.s32.totalorder %s10, 1
        %s172 = scalar_select %p171, %s10, 1
        %s173 = smul.addr %s172, 8
        %s174 = scalar_lea.vmem %s2, %s173
      $region28: #{compression_loss.1} parent=15 // pred_fallthru
        _
      // Predicated region
      $region29: #{compression_loss.1} parent=15 // pred_check
        %p175 = pneg %p108
      $region30: #{compression_loss.1} parent=15 // pred_check_branch
        %177 = sbr.rel (%p175) target = $region32
      $region31: #{compression_loss.1} parent=15 // pred_region
        %p178 = scmp.lt.s32.totalorder %s10, 1
        %s179 = scalar_select %p178, %s10, 1
        %s180 = smul.addr %s179, 8
        %s181 = scalar_lea.vmem %s3, %s180
      $region32: #{compression_loss.1} parent=15 // pred_fallthru
        _
    $region16: #{compression_loss.1} parent=5 // pred_fallthru
      _
    %p182 = scmp.le.s32.totalorder 1, %s10
    %p183 = scmp.lt.s32.totalorder %s10, 3
    %p184 = pnand %p182, %p183
    %p185 = pneg %p184
    // Predicated region
    $region33: #{compression_loss.1} parent=5 // pred_check
      _
    $region34: #{compression_loss.1} parent=5 // pred_check_branch
      %187 = sbr.rel (%p184) target = $region36
    $region35: #{compression_loss.1} parent=5 // pred_region
      %s188 = ssub.s32 %s10, 1
      %p189 = scmp.lt.s32.totalorder %s15, 1
      %s190 = scalar_select %p189, %s15, 1
      %s191 = smul.addr %s190, 8
      %s192 = scalar_lea.vmem %s0, %s191
      %p193 = pneg %p36
      %p194 = pneg %p33
      %p195 = scmp.lt.s32.totalorder %s15, 1
      %s196 = scalar_select %p195, %s15, 1
      %s197 = smul.addr %s196, 8
      %s198 = scalar_lea.vmem %s1, %s197
      %p199 = pneg %p62
      %p200 = pneg %p59
      %p201 = scmp.lt.s32.totalorder %s15, 1
      %s202 = scalar_select %p201, %s15, 1
      %s203 = smul.addr %s202, 8
      %s204 = scalar_lea.vmem %s2, %s203
      %p205 = pneg %p88
      %p206 = pneg %p85
      %p207 = scmp.lt.s32.totalorder %s15, 1
      %s208 = scalar_select %p207, %s15, 1
      %s209 = smul.addr %s208, 8
      %s210 = scalar_lea.vmem %s3, %s209
      %p211 = pneg %p114
      %p212 = pneg %p111
      %p213 = pneg %p135
      %p214 = pneg %p132
      %p215 = scmp.lt.s32.totalorder %s15, 1
      %s216 = scalar_select %p215, %s15, 1
      %s217 = smul.addr %s216, 8
      %s218 = scalar_lea.vmem %s0, %s217
      %p219 = scmp.lt.s32.totalorder %s15, 1
      %s220 = scalar_select %p219, %s15, 1
      %s221 = smul.addr %s220, 8
      %s222 = scalar_lea.vmem %s1, %s221
      %p223 = scmp.lt.s32.totalorder %s15, 1
      %s224 = scalar_select %p223, %s15, 1
      %s225 = smul.addr %s224, 8
      %s226 = scalar_lea.vmem %s2, %s225
      %p227 = scmp.lt.s32.totalorder %s15, 1
      %s228 = scalar_select %p227, %s15, 1
      %s229 = smul.addr %s228, 8
      %s230 = scalar_lea.vmem %s3, %s229
      %p231 = scmp.eq.s32.totalorder %s15, 0
      // Predicated region
      $region37: #{compression_loss.1} parent=35 // pred_check
        %p232 = pneg %p231
      $region38: #{compression_loss.1} parent=35 // pred_check_branch
        %234 = sbr.rel (%p232) target = $region40
      $region39: #{compression_loss.1} parent=35 // pred_region
        %235 = vst [vmem:[#allocation2] sm:$0xff] 0.0
        %236 = vst [vmem:[#allocation2 + $0x8] sm:$0xff] 0.0
        %237 = vst [vmem:[#allocation2 + $0x10] sm:$0xff] 0.0
      $region40: #{compression_loss.1} parent=35 // pred_fallthru
        _
      %v238 = vld [vmem:[%s218] sm:$0xff]
      %v239 = vld [vmem:[%s222] sm:$0xff]
      %v240 = vld [vmem:[%s226] sm:$0xff]
      %v241 = vld [vmem:[%s230] sm:$0xff]
      %v242 = vsub.f32 %v239, %v238
      %v243 = vsub.f32 %v240, %v238
      %v244 = vsub.f32 %v241, %v238
      %v245 = vmul.f32 %v242, %v242
      %v246 = vadd.f32 %v245, 0.0
      %v247 = vadd.f32 %v246, 0.0
      %v248 = vmul.f32 %v243, %v243
      %v249 = vadd.f32 %v248, 0.0
      %v250 = vadd.f32 %v249, 0.0
      %v251 = vmul.f32 %v244, %v244
      %v252 = vadd.f32 %v251, 0.0
      %v253 = vadd.f32 %v252, 0.0
      %v254 = vld [vmem:[#allocation2] sm:$0xff]
      %v255 = vadd.f32 %v254, %v247
      %256 = vst [vmem:[#allocation2] sm:$0xff] %v255
      %s257 = scalar_lea.vmem [#allocation2], 8
      %v258 = vld [vmem:[%s257] sm:$0xff]
      %v259 = vadd.f32 %v258, %v250
      %260 = vst [vmem:[%s257] sm:$0xff] %v259
      %s261 = scalar_lea.vmem [#allocation2], 16
      %v262 = vld [vmem:[%s261] sm:$0xff]
      %v263 = vadd.f32 %v262, %v253
      %264 = vst [vmem:[%s261] sm:$0xff] %v263
      %p265 = scmp.eq.s32.totalorder %s15, 1
      // Predicated region
      $region41: #{compression_loss.1} parent=35 // pred_check
        %p266 = pneg %p265
      $region42: #{compression_loss.1} parent=35 // pred_check_branch
        %268 = sbr.rel (%p266) target = $region44
      $region43: #{compression_loss.1} parent=35 // pred_region
        %v269 = vld [vmem:[#allocation2] sm:$0xff]
        %v270 = vld [vmem:[#allocation2 + $0x8] sm:$0xff]
        %v271 = vld [vmem:[#allocation2 + $0x10] sm:$0xff]
        %272 = vst [vmem:[%s4] sm:$0xff] %v269
        %273 = vst [vmem:[%s4 + $0x8] sm:$0xff] %v270
        %274 = vst [vmem:[%s4 + $0x10] sm:$0xff] %v271
      $region44: #{compression_loss.1} parent=35 // pred_fallthru
        _
      // Predicated region
      $region45: #{compression_loss.1} parent=35 // pred_check
        %p275 = pneg %p132
      $region46: #{compression_loss.1} parent=35 // pred_check_branch
        %277 = sbr.rel (%p275) target = $region48
      $region47: #{compression_loss.1} parent=35 // pred_region
        _
      $region48: #{compression_loss.1} parent=35 // pred_fallthru
        _
      // Predicated region
      $region49: #{compression_loss.1} parent=35 // pred_check
        %p278 = pneg %p132
      $region50: #{compression_loss.1} parent=35 // pred_check_branch
        %280 = sbr.rel (%p278) target = $region52
      $region51: #{compression_loss.1} parent=35 // pred_region
        _
      $region52: #{compression_loss.1} parent=35 // pred_fallthru
        _
    $region36: #{compression_loss.1} parent=5 // pred_fallthru
      _
    %p281 = scmp.le.s32.totalorder 2, %s10
    // Predicated region
    $region53: #{compression_loss.1} parent=5 // pred_check
      %p282 = pneg %p281
    $region54: #{compression_loss.1} parent=5 // pred_check_branch
      %284 = sbr.rel (%p282) target = $region56
    $region55: #{compression_loss.1} parent=5 // pred_region
      %s285 = ssub.s32 %s10, 2
    $region56: #{compression_loss.1} parent=5 // pred_fallthru
      _
  $region6: #{compression_loss.1} parent=0 // loop_footer
    %s14 = sadd.s32 1, %s10
  $region7: #{compression_loss.1} parent=0 // loop_footer_branch
    %9 = sbr.rel target = $region3
  $region8: #{compression_loss.1} parent=0 // loop_exit
    _

</llo_original>
